<compile_context>
chip_gen: v5e
topology: v5e:2x2
jax: 0.10.0
libtpu: 0.0.40
codegen_flags: <defaults>
</compile_context>

<pallas_src>
import functools

import jax
import jax.numpy as jnp
from jax.experimental import pallas as pl
from jax.experimental.pallas import tpu as pltpu

_BN_EPS = 1e-5


def _dual_augmentor_kernel(x_ref, w1_ref, w2_ref, vec_ref, bits_ref,
                           o1_ref, o2_ref, *, dropout_p, n_rows):
    """Fused Linear->BN->ReLU->Linear->BN->ReLU + two independent dropouts.

    vec_ref rows: 0=b1, 1=gamma1, 2=beta1, 3=b2, 4=gamma2, 5=beta2 (6,7 pad).
    bits_ref: (2, N, out_pad) uint32 random bits, one slab per view.
    """
    inv_n = jnp.float32(1.0 / n_rows)
    x = x_ref[...]

    # --- Linear 1 (MXU) ---
    h = jnp.dot(x, w1_ref[...], preferred_element_type=jnp.float32) + vec_ref[0:1, :]

    # --- BatchNorm1d #1: one-pass stats + folded affine ---
    s1 = jnp.sum(h, axis=0, keepdims=True)
    ss1 = jnp.sum(h * h, axis=0, keepdims=True)
    mean1 = s1 * inv_n
    var1 = ss1 * inv_n - mean1 * mean1
    scale1 = vec_ref[1:2, :] * jax.lax.rsqrt(var1 + _BN_EPS)   # gamma1 * rsqrt
    shift1 = vec_ref[2:3, :] - mean1 * scale1                  # beta1 - mean*scale
    h = jnp.maximum(h * scale1 + shift1, 0.0)                  # BN + ReLU

    # --- Linear 2 (MXU) ---
    y = jnp.dot(h, w2_ref[...], preferred_element_type=jnp.float32) + vec_ref[3:4, :]

    # --- BatchNorm1d #2: one-pass stats + folded affine ---
    s2 = jnp.sum(y, axis=0, keepdims=True)
    ss2 = jnp.sum(y * y, axis=0, keepdims=True)
    mean2 = s2 * inv_n
    var2 = ss2 * inv_n - mean2 * mean2
    scale2 = vec_ref[4:5, :] * jax.lax.rsqrt(var2 + _BN_EPS)
    shift2 = vec_ref[5:6, :] - mean2 * scale2
    y = jnp.maximum(y * scale2 + shift2, 0.0)                  # BN + ReLU

    # --- Dropout (training=True), integer-domain threshold, two views ---
    if dropout_p > 0.0:
        thresh = jnp.uint32(
            min(int(round((1.0 - dropout_p) * 4294967296.0)), 4294967295))
        y_scaled = y * jnp.float32(1.0 / (1.0 - dropout_p))
        o1_ref[...] = jnp.where(bits_ref[0] < thresh, y_scaled, 0.0).astype(o1_ref.dtype)
        o2_ref[...] = jnp.where(bits_ref[1] < thresh, y_scaled, 0.0).astype(o2_ref.dtype)
    else:
        o1_ref[...] = y.astype(o1_ref.dtype)
        o2_ref[...] = y.astype(o2_ref.dtype)


def _run_dual_augmentor(x, params, bits, dropout_p):
    """Single fused pallas_call producing both augmented views.

    Whole problem (a few tens of KB) fits trivially in VMEM on every TPU
    generation, so a single grid point with full-array blocks is optimal:
    both matmuls, both BatchNorms, both ReLUs and both dropout masks are
    fused in one kernel with one DMA prologue.
    """
    n = x.shape[0]
    out_pad = params["w1"].shape[1]
    kernel = functools.partial(_dual_augmentor_kernel,
                               dropout_p=float(dropout_p), n_rows=n)

    vmem = pl.BlockSpec(memory_space=pltpu.MemorySpace.VMEM)

    return pl.pallas_call(
        kernel,
        out_shape=(jax.ShapeDtypeStruct((n, out_pad), jnp.float32),
                   jax.ShapeDtypeStruct((n, out_pad), jnp.float32)),
        in_specs=[vmem,   # x
                  vmem,   # w1 (in_dim, out_pad)
                  vmem,   # w2 (out_pad, out_pad)
                  vmem,   # packed per-channel vectors (8, out_pad)
                  vmem],  # dropout random bits (2, n, out_pad) uint32
        out_specs=(vmem, vmem),
    )(x, params["w1"], params["w2"], params["vec"], bits)


def _init_feature_augmentor_params(key, in_dim, out_dim, out_pad):
    """Deterministic init mimicking PyTorch defaults, zero-padded to out_pad.

    nn.Linear: U(-1/sqrt(fan_in), 1/sqrt(fan_in)) for weight and bias.
    nn.BatchNorm1d: gamma=1, beta=0.
    Padded columns have zero weight/bias/gamma/beta so they stay exactly zero
    through Linear, BatchNorm (folded scale = 0), ReLU and dropout.
    """
    k1, k2, k3, k4 = jax.random.split(key, 4)
    lim1 = 1.0 / float(in_dim) ** 0.5
    lim2 = 1.0 / float(out_dim) ** 0.5

    w1 = jnp.zeros((in_dim, out_pad), jnp.float32).at[:, :out_dim].set(
        jax.random.uniform(k1, (in_dim, out_dim), jnp.float32, -lim1, lim1))
    b1 = jax.random.uniform(k2, (out_dim,), jnp.float32, -lim1, lim1)
    w2 = jnp.zeros((out_pad, out_pad), jnp.float32).at[:out_dim, :out_dim].set(
        jax.random.uniform(k3, (out_dim, out_dim), jnp.float32, -lim2, lim2))
    b2 = jax.random.uniform(k4, (out_dim,), jnp.float32, -lim2, lim2)

    # Packed per-channel vectors: [b1, gamma1, beta1, b2, gamma2, beta2, 0, 0]
    vec = jnp.zeros((8, out_pad), jnp.float32)
    vec = vec.at[0, :out_dim].set(b1)
    vec = vec.at[1, :out_dim].set(1.0)   # gamma1
    # row 2: beta1 = 0
    vec = vec.at[3, :out_dim].set(b2)
    vec = vec.at[4, :out_dim].set(1.0)   # gamma2
    # row 5: beta2 = 0

    return {"w1": w1, "w2": w2, "vec": vec}


class FeatureAugmentorWrapperPallas:
    """JAX/Pallas equivalent of FeatureAugmentorWrapper (encode_atom=False).

    Both torch FeatureAugmentors call torch.manual_seed(1) in __init__, so
    their weights are identical; the shared forward path is therefore computed
    once and only the two dropout masks differ.
    """

    def __init__(self, in_dim, out_dim, dropout=0.5):
        self.in_dim = in_dim
        self.out_dim = out_dim
        self.dropout = dropout
        self.out_pad = max(128, ((out_dim + 127) // 128) * 128)  # lane-dense
        self.params = _init_feature_augmentor_params(
            jax.random.PRNGKey(1), in_dim, out_dim, self.out_pad)
        # TODO(synk): OGB AtomEncoder (encode_atom=True) embedding-lookup path
        # is not implemented; only encode_atom=False is supported.
        # NOTE: BatchNorm running_mean/running_var are not tracked (forward in
        # training mode only), matching the reference module's forward output.

    def __call__(self, x, dropout_key=None):
        x = x.astype(jnp.float32)
        if dropout_key is None:
            dropout_key = jax.random.PRNGKey(42)
        n = x.shape[0]
        bits = jax.random.bits(dropout_key, (2, n, self.out_pad),
                               dtype=jnp.uint32)
        o1, o2 = _run_dual_augmentor(x, self.params, bits, self.dropout)
        return o1[:, :self.out_dim], o2[:, :self.out_dim]


if __name__ == "__main__":
    N, IN_DIM, OUT_DIM = 64, 16, 32  # 64 nodes, node features 16 -> 32

    key = jax.random.PRNGKey(0)
    x = jax.random.normal(key, (N, IN_DIM), dtype=jnp.float32)

    model = FeatureAugmentorWrapperPallas(IN_DIM, OUT_DIM, dropout=0.5)
    x1, x2 = model(x)
    jax.block_until_ready((x1, x2))

    assert x1.shape == (N, OUT_DIM) and x2.shape == (N, OUT_DIM)
    assert jnp.all(jnp.isfinite(x1)) and jnp.all(jnp.isfinite(x2))
    assert jnp.all(x1 >= 0.0) and jnp.all(x2 >= 0.0)  # ReLU + dropout outputs
    # The two views must share the pre-dropout activations but differ in mask.
    assert not jnp.array_equal(x1, x2)
    print("KERNEL_OK")
</pallas_src>

<mosaic_0001>
module attributes {stable_mosaic.version = 11 : i64} {
  func.func @_dual_augmentor_kernel(%arg0: memref<64x16xf32, #tpu.memory_space<vmem>>, %arg1: memref<16x128xf32, #tpu.memory_space<vmem>>, %arg2: memref<128x128xf32, #tpu.memory_space<vmem>>, %arg3: memref<8x128xf32, #tpu.memory_space<vmem>>, %arg4: memref<2x64x128xi32, #tpu.memory_space<vmem>>, %arg5: memref<64x128xf32, #tpu.memory_space<vmem>>, %arg6: memref<64x128xf32, #tpu.memory_space<vmem>>) attributes {dimension_semantics = [], scalar_prefetch = 0 : i64, scratch_operands = 0 : i64, tpu.core_type = #tpu.core_type<tc>} {
    %c0 = arith.constant 0 : index
    %c0_0 = arith.constant 0 : index
    %0 = vector.load %arg0[%c0, %c0_0] : memref<64x16xf32, #tpu.memory_space<vmem>>, vector<64x16xf32>
    %c0_1 = arith.constant 0 : index
    %c0_2 = arith.constant 0 : index
    %1 = vector.load %arg1[%c0_1, %c0_2] : memref<16x128xf32, #tpu.memory_space<vmem>>, vector<16x128xf32>
    %cst = arith.constant dense<0.000000e+00> : vector<64x128xf32>
    %2 = tpu.matmul %0, %1, %cst {dimension_numbers = #tpu.dot_dimension_numbers<[1], [0], [0], [1], [0, 0, 1, 1], [], []>} : vector<64x16xf32>, vector<16x128xf32>, vector<64x128xf32> -> vector<64x128xf32>
    %c0_3 = arith.constant 0 : index
    %c0_4 = arith.constant 0 : index
    %3 = vector.load %arg3[%c0_3, %c0_4] : memref<8x128xf32, #tpu.memory_space<vmem>>, vector<1x128xf32>
    %4 = vector.broadcast %3 : vector<1x128xf32> to vector<64x128xf32>
    %5 = arith.addf %2, %4 : vector<64x128xf32>
    %cst_5 = arith.constant dense<0.000000e+00> : vector<128xf32>
    %6 = vector.multi_reduction <add>, %5, %cst_5 [0] : vector<64x128xf32> to vector<128xf32>
    %7 = vector.shape_cast %6 : vector<128xf32> to vector<1x128xf32>
    %8 = arith.mulf %5, %5 : vector<64x128xf32>
    %cst_6 = arith.constant dense<0.000000e+00> : vector<128xf32>
    %9 = vector.multi_reduction <add>, %8, %cst_6 [0] : vector<64x128xf32> to vector<128xf32>
    %10 = vector.shape_cast %9 : vector<128xf32> to vector<1x128xf32>
    %cst_7 = arith.constant 1.562500e-02 : f32
    %11 = vector.broadcast %cst_7 : f32 to vector<1x128xf32>
    %12 = arith.mulf %7, %11 : vector<1x128xf32>
    %cst_8 = arith.constant 1.562500e-02 : f32
    %13 = vector.broadcast %cst_8 : f32 to vector<1x128xf32>
    %14 = arith.mulf %10, %13 : vector<1x128xf32>
    %15 = arith.mulf %12, %12 : vector<1x128xf32>
    %16 = arith.subf %14, %15 : vector<1x128xf32>
    %c1 = arith.constant 1 : index
    %c0_9 = arith.constant 0 : index
    %17 = vector.load %arg3[%c1, %c0_9] : memref<8x128xf32, #tpu.memory_space<vmem>>, vector<1x128xf32>
    %cst_10 = arith.constant 9.99999974E-6 : f32
    %18 = vector.broadcast %cst_10 : f32 to vector<1x128xf32>
    %19 = arith.addf %16, %18 : vector<1x128xf32>
    %20 = math.rsqrt %19 : vector<1x128xf32>
    %21 = arith.mulf %17, %20 : vector<1x128xf32>
    %c2 = arith.constant 2 : index
    %c0_11 = arith.constant 0 : index
    %22 = vector.load %arg3[%c2, %c0_11] : memref<8x128xf32, #tpu.memory_space<vmem>>, vector<1x128xf32>
    %23 = arith.mulf %12, %21 : vector<1x128xf32>
    %24 = arith.subf %22, %23 : vector<1x128xf32>
    %25 = vector.broadcast %21 : vector<1x128xf32> to vector<64x128xf32>
    %26 = arith.mulf %5, %25 : vector<64x128xf32>
    %27 = vector.broadcast %24 : vector<1x128xf32> to vector<64x128xf32>
    %28 = arith.addf %26, %27 : vector<64x128xf32>
    %cst_12 = arith.constant 0.000000e+00 : f32
    %29 = vector.broadcast %cst_12 : f32 to vector<64x128xf32>
    %30 = arith.maximumf %28, %29 : vector<64x128xf32>
    %c0_13 = arith.constant 0 : index
    %c0_14 = arith.constant 0 : index
    %31 = vector.load %arg2[%c0_13, %c0_14] : memref<128x128xf32, #tpu.memory_space<vmem>>, vector<128x128xf32>
    %cst_15 = arith.constant dense<0.000000e+00> : vector<64x128xf32>
    %32 = tpu.matmul %30, %31, %cst_15 {dimension_numbers = #tpu.dot_dimension_numbers<[1], [0], [0], [1], [0, 0, 1, 1], [], []>} : vector<64x128xf32>, vector<128x128xf32>, vector<64x128xf32> -> vector<64x128xf32>
    %c3 = arith.constant 3 : index
    %c0_16 = arith.constant 0 : index
    %33 = vector.load %arg3[%c3, %c0_16] : memref<8x128xf32, #tpu.memory_space<vmem>>, vector<1x128xf32>
    %34 = vector.broadcast %33 : vector<1x128xf32> to vector<64x128xf32>
    %35 = arith.addf %32, %34 : vector<64x128xf32>
    %cst_17 = arith.constant dense<0.000000e+00> : vector<128xf32>
    %36 = vector.multi_reduction <add>, %35, %cst_17 [0] : vector<64x128xf32> to vector<128xf32>
    %37 = vector.shape_cast %36 : vector<128xf32> to vector<1x128xf32>
    %38 = arith.mulf %35, %35 : vector<64x128xf32>
    %cst_18 = arith.constant dense<0.000000e+00> : vector<128xf32>
    %39 = vector.multi_reduction <add>, %38, %cst_18 [0] : vector<64x128xf32> to vector<128xf32>
    %40 = vector.shape_cast %39 : vector<128xf32> to vector<1x128xf32>
    %cst_19 = arith.constant 1.562500e-02 : f32
    %41 = vector.broadcast %cst_19 : f32 to vector<1x128xf32>
    %42 = arith.mulf %37, %41 : vector<1x128xf32>
    %cst_20 = arith.constant 1.562500e-02 : f32
    %43 = vector.broadcast %cst_20 : f32 to vector<1x128xf32>
    %44 = arith.mulf %40, %43 : vector<1x128xf32>
    %45 = arith.mulf %42, %42 : vector<1x128xf32>
    %46 = arith.subf %44, %45 : vector<1x128xf32>
    %c4 = arith.constant 4 : index
    %c0_21 = arith.constant 0 : index
    %47 = vector.load %arg3[%c4, %c0_21] : memref<8x128xf32, #tpu.memory_space<vmem>>, vector<1x128xf32>
    %cst_22 = arith.constant 9.99999974E-6 : f32
    %48 = vector.broadcast %cst_22 : f32 to vector<1x128xf32>
    %49 = arith.addf %46, %48 : vector<1x128xf32>
    %50 = math.rsqrt %49 : vector<1x128xf32>
    %51 = arith.mulf %47, %50 : vector<1x128xf32>
    %c5 = arith.constant 5 : index
    %c0_23 = arith.constant 0 : index
    %52 = vector.load %arg3[%c5, %c0_23] : memref<8x128xf32, #tpu.memory_space<vmem>>, vector<1x128xf32>
    %53 = arith.mulf %42, %51 : vector<1x128xf32>
    %54 = arith.subf %52, %53 : vector<1x128xf32>
    %55 = vector.broadcast %51 : vector<1x128xf32> to vector<64x128xf32>
    %56 = arith.mulf %35, %55 : vector<64x128xf32>
    %57 = vector.broadcast %54 : vector<1x128xf32> to vector<64x128xf32>
    %58 = arith.addf %56, %57 : vector<64x128xf32>
    %cst_24 = arith.constant 0.000000e+00 : f32
    %59 = vector.broadcast %cst_24 : f32 to vector<64x128xf32>
    %60 = arith.maximumf %58, %59 : vector<64x128xf32>
    %cst_25 = arith.constant 2.000000e+00 : f32
    %61 = vector.broadcast %cst_25 : f32 to vector<64x128xf32>
    %62 = arith.mulf %60, %61 : vector<64x128xf32>
    %c0_26 = arith.constant 0 : index
    %c0_27 = arith.constant 0 : index
    %c0_28 = arith.constant 0 : index
    %63 = vector.load %arg4[%c0_26, %c0_27, %c0_28] : memref<2x64x128xi32, #tpu.memory_space<vmem>>, vector<1x64x128xi32>
    %64 = vector.shape_cast %63 : vector<1x64x128xi32> to vector<64x128xi32>
    %c-2147483648_i32 = arith.constant -2147483648 : i32
    %65 = vector.broadcast %c-2147483648_i32 : i32 to vector<64x128xi32>
    %66 = arith.cmpi ult, %64, %65 : vector<64x128xi32>
    %cst_29 = arith.constant 0.000000e+00 : f32
    %67 = vector.broadcast %cst_29 : f32 to vector<64x128xf32>
    %68 = arith.select %66, %62, %67 : vector<64x128xi1>, vector<64x128xf32>
    %c0_30 = arith.constant 0 : index
    %c0_31 = arith.constant 0 : index
    %69 = vector.load %arg5[%c0_30, %c0_31] : memref<64x128xf32, #tpu.memory_space<vmem>>, vector<64x128xf32>
    tpu.vector_store %arg5[%c0_30, %c0_31], %68 {strides = array<i32>} : memref<64x128xf32, #tpu.memory_space<vmem>>, vector<64x128xf32>,
    %c1_32 = arith.constant 1 : index
    %c0_33 = arith.constant 0 : index
    %c0_34 = arith.constant 0 : index
    %70 = vector.load %arg4[%c1_32, %c0_33, %c0_34] : memref<2x64x128xi32, #tpu.memory_space<vmem>>, vector<1x64x128xi32>
    %71 = vector.shape_cast %70 : vector<1x64x128xi32> to vector<64x128xi32>
    %c-2147483648_i32_35 = arith.constant -2147483648 : i32
    %72 = vector.broadcast %c-2147483648_i32_35 : i32 to vector<64x128xi32>
    %73 = arith.cmpi ult, %71, %72 : vector<64x128xi32>
    %cst_36 = arith.constant 0.000000e+00 : f32
    %74 = vector.broadcast %cst_36 : f32 to vector<64x128xf32>
    %75 = arith.select %73, %62, %74 : vector<64x128xi1>, vector<64x128xf32>
    %c0_37 = arith.constant 0 : index
    %c0_38 = arith.constant 0 : index
    %76 = vector.load %arg6[%c0_37, %c0_38] : memref<64x128xf32, #tpu.memory_space<vmem>>, vector<64x128xf32>
    tpu.vector_store %arg6[%c0_37, %c0_38], %75 {strides = array<i32>} : memref<64x128xf32, #tpu.memory_space<vmem>>, vector<64x128xf32>,
    return
  }
}

</mosaic_0001>

<llo_original>
// kernel: tpu_custom_call.1
$region0: #{tpu_custom_call.1}
  #allocation0 [shape = 'u32[]', space=smem, size = 0x4, offset = 0x4, fixed_abs, tag = 'smem constant byte address 0x4 - core index']
  #allocation1 [shape = 'u32[72,128]{1,0:T(1,128)}', space=vmem, size = 0x9000, scoped, tag = 'internal scratch']
  %s0 = inlined_call_operand.vmem [shape: f32[64,16], index: 0, kind: input, shape index: {}]
  %s1 = inlined_call_operand.vmem [shape: f32[16,128], index: 1, kind: input, shape index: {}]
  %s2 = inlined_call_operand.hbm [shape: f32[128,128], index: 2, kind: input, shape index: {}]
  %s3 = inlined_call_operand.vmem [shape: f32[8,128], index: 3, kind: input, shape index: {}]
  %s4 = inlined_call_operand.hbm [shape: u32[2,64,128], index: 4, kind: input, shape index: {}]
  %s5 = inlined_call_operand.hbm [shape: f32[64,128], index: 5, kind: output, shape index: {0}]
  %s6 = inlined_call_operand.hbm [shape: f32[64,128], index: 6, kind: output, shape index: {1}]
  %7 = xla_tuple %s5, %s6
  %s8 = sld [smem:[#allocation0]]
  $region46: #{tpu_custom_call.1} parent=0
    _
  %s10 = ssub.s32 1, %s8
  %s11 = scalar_select 0, %s10, %s8
  $region1: #{tpu_custom_call.1} parent=0
    #allocation2 [shape = 'u8[65536]{0}', space=vmem, size = 0x10000, scoped, tag = 'input window, operand 2, single buffered']
    #allocation3 [shape = 's32[1]{0}', space=sflag, size = 0x4, scoped, tag = 'scoped memory for tpu_custom_call.1']
    #allocation4 [shape = 's32[1]{0}', space=sflag, size = 0x4, scoped, tag = 'scoped memory for tpu_custom_call.1']
    #allocation5 [shape = 'u8[65536]{0}', space=vmem, size = 0x10000, scoped, tag = 'input window, operand 4, single buffered']
    #allocation6 [shape = 's32[1]{0}', space=sflag, size = 0x4, scoped, tag = 'scoped memory for tpu_custom_call.1']
    #allocation7 [shape = 'u8[32768]{0}', space=vmem, size = 0x8000, scoped, tag = 'output window, operand 0, single buffered']
    #allocation8 [shape = 'u8[32768]{0}', space=vmem, size = 0x8000, scoped, tag = 'output window, operand 1, single buffered']
    #allocation9 [shape = 's32[1]{0}', space=sflag, size = 0x4, scoped, tag = 'scoped memory for tpu_custom_call.1']
    %12 = vsyncpa [#allocation3], 0
    %13 = vsyncpa [#allocation6], 0
    %14 = vsyncpa [#allocation4], 0
    %15 = vsyncpa [#allocation9], 0
    // Predicated region
    $region2: #{tpu_custom_call.1} parent=1 // pred_check
      _
    $region3: #{tpu_custom_call.1} parent=1 // pred_check_branch
      %17 = sbr.rel (0) target = $region5
    $region4: #{tpu_custom_call.1} parent=1 // pred_region
      _
    $region5: #{tpu_custom_call.1} parent=1 // pred_fallthru
      _
    // Predicated region
    $region6: #{tpu_custom_call.1} parent=1 // pred_check
      _
    $region7: #{tpu_custom_call.1} parent=1 // pred_check_branch
      %19 = sbr.rel (0) target = $region9
    $region8: #{tpu_custom_call.1} parent=1 // pred_region
      _
    $region9: #{tpu_custom_call.1} parent=1 // pred_fallthru
      _
    // Predicated region
    $region10: #{tpu_custom_call.1} parent=1 // pred_check
      _
    $region11: #{tpu_custom_call.1} parent=1 // pred_check_branch
      %21 = sbr.rel (0) target = $region13
    $region12: #{tpu_custom_call.1} parent=1 // pred_region
      %23 = vsyncadd [#allocation3], 0
      %s24 = sshll.u32 %s2, 4
      %s25 = int_to_ptr.hbm [resolvable:$true] %s24
      %s26 = sshll.u32 [#allocation2], 4
      %s27 = int_to_ptr.vmem [resolvable:$true] %s26
      %32 = dma.hbm_to_vmem [thread:$0]  %s25, 2048, %s27, [#allocation3], 128, 128, 8
    $region13: #{tpu_custom_call.1} parent=1 // pred_fallthru
      _
    // Predicated region
    $region14: #{tpu_custom_call.1} parent=1 // pred_check
      _
    $region15: #{tpu_custom_call.1} parent=1 // pred_check_branch
      %34 = sbr.rel (0) target = $region17
    $region16: #{tpu_custom_call.1} parent=1 // pred_region
      _
    $region17: #{tpu_custom_call.1} parent=1 // pred_fallthru
      _
    // Predicated region
    $region18: #{tpu_custom_call.1} parent=1 // pred_check
      _
    $region19: #{tpu_custom_call.1} parent=1 // pred_check_branch
      %36 = sbr.rel (0) target = $region21
    $region20: #{tpu_custom_call.1} parent=1 // pred_region
      %38 = vsyncadd [#allocation6], 0
      %s39 = sshll.u32 %s4, 4
      %s40 = int_to_ptr.hbm [resolvable:$true] %s39
      %s41 = sshll.u32 [#allocation5], 4
      %s42 = int_to_ptr.vmem [resolvable:$true] %s41
      %47 = dma.hbm_to_vmem [thread:$0]  %s40, 2048, %s42, [#allocation6], 128, 128, 8
    $region21: #{tpu_custom_call.1} parent=1 // pred_fallthru
      _
    // Predicated region
    $region22: #{tpu_custom_call.1} parent=1 // pred_check
      _
    $region23: #{tpu_custom_call.1} parent=1 // pred_check_branch
      %49 = sbr.rel (0) target = $region25
    $region24: #{tpu_custom_call.1} parent=1 // pred_region
      %51 = dma.done [#allocation3], 2048
    $region25: #{tpu_custom_call.1} parent=1 // pred_fallthru
      _
    // Predicated region
    $region26: #{tpu_custom_call.1} parent=1 // pred_check
      _
    $region27: #{tpu_custom_call.1} parent=1 // pred_check_branch
      %53 = sbr.rel (0) target = $region29
    $region28: #{tpu_custom_call.1} parent=1 // pred_region
      %55 = dma.done [#allocation6], 2048
    $region29: #{tpu_custom_call.1} parent=1 // pred_fallthru
      _
    %v56 = vld [vmem:[%s0] sm:$0xff]
    %v57 = vld [vmem:[%s0 + $0x8] sm:$0xff]
    %v58 = vld [vmem:[%s0 + $0x10] sm:$0xff]
    %v59 = vld [vmem:[%s0 + $0x18] sm:$0xff]
    %v60 = vld [vmem:[%s0 + $0x20] sm:$0xff]
    %v61 = vld [vmem:[%s0 + $0x28] sm:$0xff]
    %v62 = vld [vmem:[%s0 + $0x30] sm:$0xff]
    %v63 = vld [vmem:[%s0 + $0x38] sm:$0xff]
    %v64 = vld [vmem:[%s1] sm:$0xff]
    %v65 = vld [vmem:[%s1 + $0x8] sm:$0xff]
    %v66 = vld [vmem:[%s3] sm:$0x1]
    %v67 = vperm.slane %v66, 0
    %vm68 = vcmask 130048
    %v70 = vsel %vm68, %v56, 0
    %v73 = vsel %vm68, %v57, 0
    %v76 = vsel %vm68, %v58, 0
    %v79 = vsel %vm68, %v59, 0
    %v82 = vsel %vm68, %v60, 0
    %v85 = vsel %vm68, %v61, 0
    %v88 = vsel %vm68, %v62, 0
    %v91 = vsel %vm68, %v63, 0
    %93 = vmatpush.msra.mxu0 0.0
    %94 = vmatpush.msra.mxu0 0.0
    %95 = vmatpush.msra.mxu0 0.0
    %96 = vmatpush.msra.mxu0 0.0
    %97 = vmatpush.msra.mxu0 0.0
    %98 = vmatpush.msra.mxu0 0.0
    %99 = vmatpush.msra.mxu0 0.0
    %100 = vmatpush.msra.mxu0 0.0
    %101 = vmatpush.msra.mxu0 0.0
    %102 = vmatpush.msra.mxu0 0.0
    %103 = vmatpush.msra.mxu0 0.0
    %104 = vmatpush.msra.mxu0 0.0
    %105 = vmatpush.msra.mxu0 0.0
    %106 = vmatpush.msra.mxu0 0.0
    %107 = vmatpush.msra.mxu0 %v65
    %108 = vmatpush.msra.mxu0 %v64
    %109 = vmatmul.f32.gmra.mxu0 %v70
    %v110 = vpop.f32.mrf.mxu0
    %v111 = vadd.f32 %v67, %v110
    %112 = vmatmul.f32.gmra.mxu0 %v73
    %v113 = vpop.f32.mrf.mxu0
    %v114 = vadd.f32 %v67, %v113
    %115 = vmatmul.f32.gmra.mxu0 %v76
    %v116 = vpop.f32.mrf.mxu0
    %v117 = vadd.f32 %v67, %v116
    %118 = vmatmul.f32.gmra.mxu0 %v79
    %v119 = vpop.f32.mrf.mxu0
    %v120 = vadd.f32 %v67, %v119
    %121 = vmatmul.f32.gmra.mxu0 %v82
    %v122 = vpop.f32.mrf.mxu0
    %v123 = vadd.f32 %v67, %v122
    %124 = vmatmul.f32.gmra.mxu0 %v85
    %v125 = vpop.f32.mrf.mxu0
    %v126 = vadd.f32 %v67, %v125
    %127 = vmatmul.f32.gmra.mxu0 %v88
    %v128 = vpop.f32.mrf.mxu0
    %v129 = vadd.f32 %v67, %v128
    %130 = vmatmul.f32.gmra.mxu0 %v91
    %v131 = vpop.f32.mrf.mxu0
    %v132 = vadd.f32 %v67, %v131
    %133 = vdwg.mxu0
    %v134 = vadd.f32 %v111, %v114
    %v135 = vadd.f32 %v134, %v117
    %v136 = vadd.f32 %v135, %v120
    %v137 = vadd.f32 %v136, %v123
    %v138 = vadd.f32 %v137, %v126
    %v139 = vadd.f32 %v138, %v129
    %v140 = vadd.f32 %v139, %v132
    %v141 = vrot.slane %v140, 4
    %v142 = vadd.f32 %v140, %v141
    %v143 = vrot.slane %v142, 2
    %v144 = vadd.f32 %v142, %v143
    %v145 = vrot.slane %v144, 1
    %v146 = vadd.f32 %v144, %v145
    %v147 = vmul.f32 %v111, %v111
    %v148 = vmul.f32 %v114, %v114
    %v149 = vmul.f32 %v117, %v117
    %v150 = vmul.f32 %v120, %v120
    %v151 = vmul.f32 %v123, %v123
    %v152 = vmul.f32 %v126, %v126
    %v153 = vmul.f32 %v129, %v129
    %v154 = vmul.f32 %v132, %v132
    %v155 = vadd.f32 %v147, %v148
    %v156 = vadd.f32 %v155, %v149
    %v157 = vadd.f32 %v156, %v150
    %v158 = vadd.f32 %v157, %v151
    %v159 = vadd.f32 %v158, %v152
    %v160 = vadd.f32 %v159, %v153
    %v161 = vadd.f32 %v160, %v154
    %v162 = vrot.slane %v161, 4
    %v163 = vadd.f32 %v161, %v162
    %v164 = vrot.slane %v163, 2
    %v165 = vadd.f32 %v163, %v164
    %v166 = vrot.slane %v165, 1
    %v167 = vadd.f32 %v165, %v166
    %v168 = vmul.f32 %v146, 0.015625
    %v169 = vmul.f32 %v167, 0.015625
    %v170 = vmul.f32 %v168, %v168
    %v171 = vsub.f32 %v169, %v170
    %v172 = vld [vmem:[%s3 + $0x1] sm:$0x1]
    %v173 = vadd.f32 %v171, 1e-05
    %v174 = vrsqrt.pop %v173
    %v175 = vmul.f32 %v174, %v173
    %v176 = vmul.f32 %v175, %v174
    %v177 = vmul.f32 0.5, %v176
    %v178 = vsub.f32 1.5, %v177
    %v179 = vmul.f32 %v174, %v178
    %vm180 = vweird.f32 %v173
    %vm181 = vweird.f32 %v174
    %vm182 = vmor %vm180, %vm181
    %v183 = vsel %vm182, %v174, %v179
    %v184 = vmul.f32 %v172, %v183
    %v185 = vld [vmem:[%s3 + $0x2] sm:$0x1]
    %v186 = vmul.f32 %v168, %v184
    %v187 = vsub.f32 %v185, %v186
    %v188 = vperm.slane %v184, 0
    %v189 = vmul.f32 %v111, %v188
    %v190 = vmul.f32 %v114, %v188
    %v191 = vmul.f32 %v117, %v188
    %v192 = vmul.f32 %v120, %v188
    %v193 = vmul.f32 %v123, %v188
    %v194 = vmul.f32 %v126, %v188
    %v195 = vmul.f32 %v129, %v188
    %v196 = vmul.f32 %v132, %v188
    %v197 = vperm.slane %v187, 0
    %v198 = vadd.f32 %v189, %v197
    %v199 = vadd.f32 %v190, %v197
    %v200 = vadd.f32 %v191, %v197
    %v201 = vadd.f32 %v192, %v197
    %v202 = vadd.f32 %v193, %v197
    %v203 = vadd.f32 %v194, %v197
    %v204 = vadd.f32 %v195, %v197
    %v205 = vadd.f32 %v196, %v197
    %v206 = vmax.f32 %v198, 0.0
    %v207 = vmax.f32 %v199, 0.0
    %v208 = vmax.f32 %v200, 0.0
    %v209 = vmax.f32 %v201, 0.0
    %v210 = vmax.f32 %v202, 0.0
    %v211 = vmax.f32 %v203, 0.0
    %v212 = vmax.f32 %v204, 0.0
    %v213 = vmax.f32 %v205, 0.0
    %v214 = vld [vmem:[#allocation2] sm:$0xff]
    %v215 = vld [vmem:[#allocation2 + $0x8] sm:$0xff]
    %v216 = vld [vmem:[#allocation2 + $0x10] sm:$0xff]
    %v217 = vld [vmem:[#allocation2 + $0x18] sm:$0xff]
    %v218 = vld [vmem:[#allocation2 + $0x20] sm:$0xff]
    %v219 = vld [vmem:[#allocation2 + $0x28] sm:$0xff]
    %v220 = vld [vmem:[#allocation2 + $0x30] sm:$0xff]
    %v221 = vld [vmem:[#allocation2 + $0x38] sm:$0xff]
    %v222 = vld [vmem:[#allocation2 + $0x40] sm:$0xff]
    %v223 = vld [vmem:[#allocation2 + $0x48] sm:$0xff]
    %v224 = vld [vmem:[#allocation2 + $0x50] sm:$0xff]
    %v225 = vld [vmem:[#allocation2 + $0x58] sm:$0xff]
    %v226 = vld [vmem:[#allocation2 + $0x60] sm:$0xff]
    %v227 = vld [vmem:[#allocation2 + $0x68] sm:$0xff]
    %v228 = vld [vmem:[#allocation2 + $0x70] sm:$0xff]
    %v229 = vld [vmem:[#allocation2 + $0x78] sm:$0xff]
    %v230 = vld [vmem:[%s3 + $0x3] sm:$0x1]
    %v231 = vperm.slane %v230, 0
    %232 = vmatpush.msra.mxu0 %v229
    %233 = vmatpush.msra.mxu0 %v228
    %234 = vmatpush.msra.mxu0 %v227
    %235 = vmatpush.msra.mxu0 %v226
    %236 = vmatpush.msra.mxu0 %v225
    %237 = vmatpush.msra.mxu0 %v224
    %238 = vmatpush.msra.mxu0 %v223
    %239 = vmatpush.msra.mxu0 %v222
    %240 = vmatpush.msra.mxu0 %v221
    %241 = vmatpush.msra.mxu0 %v220
    %242 = vmatpush.msra.mxu0 %v219
    %243 = vmatpush.msra.mxu0 %v218
    %244 = vmatpush.msra.mxu0 %v217
    %245 = vmatpush.msra.mxu0 %v216
    %246 = vmatpush.msra.mxu0 %v215
    %247 = vmatpush.msra.mxu0 %v214
    %248 = vmatmul.f32.gmra.mxu0 %v206
    %v249 = vpop.f32.mrf.mxu0
    %v250 = vadd.f32 %v231, %v249
    %251 = vmatmul.f32.gmra.mxu0 %v207
    %v252 = vpop.f32.mrf.mxu0
    %v253 = vadd.f32 %v231, %v252
    %254 = vmatmul.f32.gmra.mxu0 %v208
    %v255 = vpop.f32.mrf.mxu0
    %v256 = vadd.f32 %v231, %v255
    %257 = vmatmul.f32.gmra.mxu0 %v209
    %v258 = vpop.f32.mrf.mxu0
    %v259 = vadd.f32 %v231, %v258
    %260 = vmatmul.f32.gmra.mxu0 %v210
    %v261 = vpop.f32.mrf.mxu0
    %v262 = vadd.f32 %v231, %v261
    %263 = vmatmul.f32.gmra.mxu0 %v211
    %v264 = vpop.f32.mrf.mxu0
    %v265 = vadd.f32 %v231, %v264
    %266 = vmatmul.f32.gmra.mxu0 %v212
    %v267 = vpop.f32.mrf.mxu0
    %v268 = vadd.f32 %v231, %v267
    %269 = vmatmul.f32.gmra.mxu0 %v213
    %v270 = vpop.f32.mrf.mxu0
    %v271 = vadd.f32 %v231, %v270
    %272 = vdwg.mxu0
    %v273 = vadd.f32 %v250, %v253
    %v274 = vadd.f32 %v273, %v256
    %v275 = vadd.f32 %v274, %v259
    %v276 = vadd.f32 %v275, %v262
    %v277 = vadd.f32 %v276, %v265
    %v278 = vadd.f32 %v277, %v268
    %v279 = vadd.f32 %v278, %v271
    %v280 = vrot.slane %v279, 4
    %v281 = vadd.f32 %v279, %v280
    %v282 = vrot.slane %v281, 2
    %v283 = vadd.f32 %v281, %v282
    %v284 = vrot.slane %v283, 1
    %v285 = vadd.f32 %v283, %v284
    %v286 = vmul.f32 %v250, %v250
    %v287 = vmul.f32 %v253, %v253
    %v288 = vmul.f32 %v256, %v256
    %v289 = vmul.f32 %v259, %v259
    %v290 = vmul.f32 %v262, %v262
    %v291 = vmul.f32 %v265, %v265
    %v292 = vmul.f32 %v268, %v268
    %v293 = vmul.f32 %v271, %v271
    %v294 = vadd.f32 %v286, %v287
    %v295 = vadd.f32 %v294, %v288
    %v296 = vadd.f32 %v295, %v289
    %v297 = vadd.f32 %v296, %v290
    %v298 = vadd.f32 %v297, %v291
    %v299 = vadd.f32 %v298, %v292
    %v300 = vadd.f32 %v299, %v293
    %v301 = vrot.slane %v300, 4
    %v302 = vadd.f32 %v300, %v301
    %v303 = vrot.slane %v302, 2
    %v304 = vadd.f32 %v302, %v303
    %v305 = vrot.slane %v304, 1
    %v306 = vadd.f32 %v304, %v305
    %v307 = vmul.f32 %v285, 0.015625
    %v308 = vmul.f32 %v306, 0.015625
    %v309 = vmul.f32 %v307, %v307
    %v310 = vsub.f32 %v308, %v309
    %v311 = vld [vmem:[%s3 + $0x4] sm:$0x1]
    %v312 = vadd.f32 %v310, 1e-05
    %v313 = vrsqrt.pop %v312
    %v314 = vmul.f32 %v313, %v312
    %v315 = vmul.f32 %v314, %v313
    %v316 = vmul.f32 0.5, %v315
    %v317 = vsub.f32 1.5, %v316
    %v318 = vmul.f32 %v313, %v317
    %vm319 = vweird.f32 %v312
    %vm320 = vweird.f32 %v313
    %vm321 = vmor %vm319, %vm320
    %v322 = vsel %vm321, %v313, %v318
    %v323 = vmul.f32 %v311, %v322
    %v324 = vld [vmem:[%s3 + $0x5] sm:$0x1]
    %v325 = vmul.f32 %v307, %v323
    %v326 = vsub.f32 %v324, %v325
    %v327 = vperm.slane %v323, 0
    %v328 = vmul.f32 %v250, %v327
    %v329 = vmul.f32 %v253, %v327
    %v330 = vmul.f32 %v256, %v327
    %v331 = vmul.f32 %v259, %v327
    %v332 = vmul.f32 %v262, %v327
    %v333 = vmul.f32 %v265, %v327
    %v334 = vmul.f32 %v268, %v327
    %v335 = vmul.f32 %v271, %v327
    %v336 = vperm.slane %v326, 0
    %v337 = vadd.f32 %v328, %v336
    %v338 = vadd.f32 %v329, %v336
    %v339 = vadd.f32 %v330, %v336
    %v340 = vadd.f32 %v331, %v336
    %v341 = vadd.f32 %v332, %v336
    %v342 = vadd.f32 %v333, %v336
    %v343 = vadd.f32 %v334, %v336
    %v344 = vadd.f32 %v335, %v336
    %v345 = vmax.f32 %v337, 0.0
    %v346 = vmax.f32 %v338, 0.0
    %v347 = vmax.f32 %v339, 0.0
    %v348 = vmax.f32 %v340, 0.0
    %v349 = vmax.f32 %v341, 0.0
    %v350 = vmax.f32 %v342, 0.0
    %v351 = vmax.f32 %v343, 0.0
    %v352 = vmax.f32 %v344, 0.0
    %v353 = vmul.f32 %v345, 2.0
    %v354 = vmul.f32 %v346, 2.0
    %v355 = vmul.f32 %v347, 2.0
    %v356 = vmul.f32 %v348, 2.0
    %v357 = vmul.f32 %v349, 2.0
    %v358 = vmul.f32 %v350, 2.0
    %v359 = vmul.f32 %v351, 2.0
    %v360 = vmul.f32 %v352, 2.0
    %v361 = vld [vmem:[#allocation5] sm:$0xff]
    %v362 = vld [vmem:[#allocation5 + $0x8] sm:$0xff]
    %v363 = vld [vmem:[#allocation5 + $0x10] sm:$0xff]
    %v364 = vld [vmem:[#allocation5 + $0x18] sm:$0xff]
    %v365 = vld [vmem:[#allocation5 + $0x20] sm:$0xff]
    %v366 = vld [vmem:[#allocation5 + $0x28] sm:$0xff]
    %v367 = vld [vmem:[#allocation5 + $0x30] sm:$0xff]
    %v368 = vld [vmem:[#allocation5 + $0x38] sm:$0xff]
    %v369 = vadd.s32 %v361, 2147483648
    %vm371 = vcmp.lt.s32.totalorder %v369, 0
    %v372 = vadd.s32 %v362, 2147483648
    %vm374 = vcmp.lt.s32.totalorder %v372, 0
    %v375 = vadd.s32 %v363, 2147483648
    %vm377 = vcmp.lt.s32.totalorder %v375, 0
    %v378 = vadd.s32 %v364, 2147483648
    %vm380 = vcmp.lt.s32.totalorder %v378, 0
    %v381 = vadd.s32 %v365, 2147483648
    %vm383 = vcmp.lt.s32.totalorder %v381, 0
    %v384 = vadd.s32 %v366, 2147483648
    %vm386 = vcmp.lt.s32.totalorder %v384, 0
    %v387 = vadd.s32 %v367, 2147483648
    %vm389 = vcmp.lt.s32.totalorder %v387, 0
    %v390 = vadd.s32 %v368, 2147483648
    %vm392 = vcmp.lt.s32.totalorder %v390, 0
    %v393 = vsel %vm371, %v353, 0.0
    %v394 = vsel %vm374, %v354, 0.0
    %v395 = vsel %vm377, %v355, 0.0
    %v396 = vsel %vm380, %v356, 0.0
    %v397 = vsel %vm383, %v357, 0.0
    %v398 = vsel %vm386, %v358, 0.0
    %v399 = vsel %vm389, %v359, 0.0
    %v400 = vsel %vm392, %v360, 0.0
    %401 = vst [vmem:[#allocation7] sm:$0xff] %v393
    %402 = vst [vmem:[#allocation7 + $0x8] sm:$0xff] %v394
    %403 = vst [vmem:[#allocation7 + $0x10] sm:$0xff] %v395
    %404 = vst [vmem:[#allocation7 + $0x18] sm:$0xff] %v396
    %405 = vst [vmem:[#allocation7 + $0x20] sm:$0xff] %v397
    %406 = vst [vmem:[#allocation7 + $0x28] sm:$0xff] %v398
    %407 = vst [vmem:[#allocation7 + $0x30] sm:$0xff] %v399
    %408 = vst [vmem:[#allocation7 + $0x38] sm:$0xff] %v400
    %s409 = scalar_lea.vmem [#allocation5], 64
    %v410 = vld [vmem:[%s409] sm:$0xff]
    %v411 = vld [vmem:[%s409 + $0x8] sm:$0xff]
    %v412 = vld [vmem:[%s409 + $0x10] sm:$0xff]
    %v413 = vld [vmem:[%s409 + $0x18] sm:$0xff]
    %v414 = vld [vmem:[%s409 + $0x20] sm:$0xff]
    %v415 = vld [vmem:[%s409 + $0x28] sm:$0xff]
    %v416 = vld [vmem:[%s409 + $0x30] sm:$0xff]
    %v417 = vld [vmem:[%s409 + $0x38] sm:$0xff]
    %v418 = vadd.s32 %v410, 2147483648
    %vm420 = vcmp.lt.s32.totalorder %v418, 0
    %v421 = vadd.s32 %v411, 2147483648
    %vm423 = vcmp.lt.s32.totalorder %v421, 0
    %v424 = vadd.s32 %v412, 2147483648
    %vm426 = vcmp.lt.s32.totalorder %v424, 0
    %v427 = vadd.s32 %v413, 2147483648
    %vm429 = vcmp.lt.s32.totalorder %v427, 0
    %v430 = vadd.s32 %v414, 2147483648
    %vm432 = vcmp.lt.s32.totalorder %v430, 0
    %v433 = vadd.s32 %v415, 2147483648
    %vm435 = vcmp.lt.s32.totalorder %v433, 0
    %v436 = vadd.s32 %v416, 2147483648
    %vm438 = vcmp.lt.s32.totalorder %v436, 0
    %v439 = vadd.s32 %v417, 2147483648
    %vm441 = vcmp.lt.s32.totalorder %v439, 0
    %v442 = vsel %vm420, %v353, 0.0
    %v443 = vsel %vm423, %v354, 0.0
    %v444 = vsel %vm426, %v355, 0.0
    %v445 = vsel %vm429, %v356, 0.0
    %v446 = vsel %vm432, %v357, 0.0
    %v447 = vsel %vm435, %v358, 0.0
    %v448 = vsel %vm438, %v359, 0.0
    %v449 = vsel %vm441, %v360, 0.0
    %450 = vst [vmem:[#allocation8] sm:$0xff] %v442
    %451 = vst [vmem:[#allocation8 + $0x8] sm:$0xff] %v443
    %452 = vst [vmem:[#allocation8 + $0x10] sm:$0xff] %v444
    %453 = vst [vmem:[#allocation8 + $0x18] sm:$0xff] %v445
    %454 = vst [vmem:[#allocation8 + $0x20] sm:$0xff] %v446
    %455 = vst [vmem:[#allocation8 + $0x28] sm:$0xff] %v447
    %456 = vst [vmem:[#allocation8 + $0x30] sm:$0xff] %v448
    %457 = vst [vmem:[#allocation8 + $0x38] sm:$0xff] %v449
    // Predicated region
    $region30: #{tpu_custom_call.1} parent=1 // pred_check
      _
    $region31: #{tpu_custom_call.1} parent=1 // pred_check_branch
      %459 = sbr.rel (0) target = $region33
    $region32: #{tpu_custom_call.1} parent=1 // pred_region
      %461 = vsyncadd [#allocation4], 0
      %s462 = sshll.u32 [#allocation7], 4
      %s463 = int_to_ptr.vmem [resolvable:$true] %s462
      %s464 = sshll.u32 %s5, 4
      %s465 = int_to_ptr.hbm [resolvable:$true] %s464
      %470 = dma.vmem_to_hbm [thread:$0]  %s463, 1024, %s465, [#allocation4], 128, 128, 8
    $region33: #{tpu_custom_call.1} parent=1 // pred_fallthru
      _
    // Predicated region
    $region34: #{tpu_custom_call.1} parent=1 // pred_check
      _
    $region35: #{tpu_custom_call.1} parent=1 // pred_check_branch
      %472 = sbr.rel (0) target = $region37
    $region36: #{tpu_custom_call.1} parent=1 // pred_region
      %474 = vsyncadd [#allocation9], 0
      %s475 = sshll.u32 [#allocation8], 4
      %s476 = int_to_ptr.vmem [resolvable:$true] %s475
      %s477 = sshll.u32 %s6, 4
      %s478 = int_to_ptr.hbm [resolvable:$true] %s477
      %483 = dma.vmem_to_hbm [thread:$0]  %s476, 1024, %s478, [#allocation9], 128, 128, 8
    $region37: #{tpu_custom_call.1} parent=1 // pred_fallthru
      _
    // Predicated region
    $region38: #{tpu_custom_call.1} parent=1 // pred_check
      _
    $region39: #{tpu_custom_call.1} parent=1 // pred_check_branch
      %485 = sbr.rel (0) target = $region41
    $region40: #{tpu_custom_call.1} parent=1 // pred_region
      %487 = dma.done [#allocation4], 1024
    $region41: #{tpu_custom_call.1} parent=1 // pred_fallthru
      _
    // Predicated region
    $region42: #{tpu_custom_call.1} parent=1 // pred_check
      _
    $region43: #{tpu_custom_call.1} parent=1 // pred_check_branch
      %489 = sbr.rel (0) target = $region45
    $region44: #{tpu_custom_call.1} parent=1 // pred_region
      %491 = dma.done [#allocation9], 1024
    $region45: #{tpu_custom_call.1} parent=1 // pred_fallthru
      _
    %492 = vsyncpa [#allocation3], 1
    %493 = vsyncpa [#allocation6], 1
    %494 = vsyncpa [#allocation4], 1
    %495 = vsyncpa [#allocation9], 1

</llo_original>
